<compile_context>
chip_gen: v5e
topology: v5e:2x2
jax: 0.10.0
libtpu: 0.0.40
codegen_flags: <defaults>
</compile_context>

<pallas_src>
import functools

import jax
import jax.numpy as jnp
from jax.experimental import pallas as pl
from jax.experimental.pallas import tpu as pltpu

_LANE = 128


def _orthogonal(key, shape, dtype=jnp.float32):
    """Deterministic orthogonal init (mimics torch.nn.init.orthogonal_ shapes)."""
    rows, cols = shape
    n = max(rows, cols)
    a = jax.random.normal(key, (n, n), dtype=jnp.float32)
    q, r = jnp.linalg.qr(a)
    s = jnp.sign(jnp.diag(r))
    s = jnp.where(s == 0, 1.0, s)  # guard: zero diag entry must not zero a column
    q = q * s[None, :]
    return q[:rows, :cols].astype(dtype)


def _round_up(x, m):
    return ((x + m - 1) // m) * m


def _large_batch_tile_m():
    """MXU-M tile for batch > 512: 256 on v6e/v7x (2x256^2 MXU), 128 on v5e."""
    try:
        kind = jax.devices()[0].device_kind.lower()
    except Exception:
        return 256
    return 128 if "v5" in kind else 256


# --------------------------------------------------------------------------- #
# One-time parameter preparation (hoisted out of the per-call path).
# --------------------------------------------------------------------------- #
def prepare_params(params):
    """Transpose torch-layout (out,in) weights to (in,out) and zero-pad the
    hidden / output feature dims up to a multiple of 128 lanes.  Do this ONCE
    and reuse the result for every forward call.  Padding with zeros is
    semantics-preserving (tanh(0)=0, zero rows/cols contribute 0)."""

    def pad_to(w, rows, cols):
        return jnp.pad(w, ((0, rows - w.shape[0]), (0, cols - w.shape[1])))

    w1 = params["W1"].T  # (in, hidden)
    w2 = params["W2"].T  # (hidden, hidden)
    w3 = params["W3"].T  # (hidden, out)
    in_dim, hidden = w1.shape
    out_dim = w3.shape[1]
    hp = _round_up(max(hidden, _LANE), _LANE)   # lane-dense hidden width
    op = _round_up(max(out_dim, _LANE), _LANE)  # lane-dense output width

    prep = {
        "w1": pad_to(w1, in_dim, hp),
        "b1": pad_to(params["b1"].reshape(1, -1), 1, hp),
        "w2": pad_to(w2, hp, hp),
        "b2": pad_to(params["b2"].reshape(1, -1), 1, hp),
        "w3": pad_to(w3, hp, op),
        "b3": pad_to(params["b3"].reshape(1, -1), 1, op),
    }
    return prep, out_dim


# --------------------------------------------------------------------------- #
# Kernel: one batch tile (tm rows), all feature dims lane-dense (128-padded).
# --------------------------------------------------------------------------- #
def _mlp_kernel(x_ref, w1_ref, b1_ref, w2_ref, b2_ref, w3_ref, b3_ref, o_ref):
    x = x_ref[...]
    h = jnp.tanh(
        jnp.dot(x, w1_ref[...], preferred_element_type=jnp.float32) + b1_ref[...]
    )
    h = jnp.tanh(
        jnp.dot(h, w2_ref[...], preferred_element_type=jnp.float32) + b2_ref[...]
    )
    y = jnp.dot(h, w3_ref[...], preferred_element_type=jnp.float32) + b3_ref[...]
    o_ref[...] = y.astype(o_ref.dtype)  # (tm, 128*k) -> unmasked lane-dense store


# --------------------------------------------------------------------------- #
# Wrapper: grid over the batch axis; weights stay VMEM-resident.
# --------------------------------------------------------------------------- #
@functools.partial(jax.jit, static_argnames=("out_dim", "tm"))
def mlp_forward(x, prep, *, out_dim, tm=None):
    batch, in_dim = x.shape
    hp = prep["w1"].shape[1]
    op = prep["w3"].shape[1]

    # --- batch (MXU M) tile selection --------------------------------------
    if tm is None:
        if batch <= 512:
            # Single grid step: per-step overhead (~0.35 us) dwarfs compute here.
            tm_eff = _round_up(max(batch, 8), 8)
        else:
            tm_eff = _large_batch_tile_m()
    else:
        tm_eff = tm if batch >= tm else _round_up(max(batch, 8), 8)

    padded_batch = _round_up(batch, tm_eff)
    if padded_batch != batch:
        x = jnp.pad(x, ((0, padded_batch - batch), (0, 0)))
    grid_steps = padded_batch // tm_eff
    grid = (grid_steps,)

    # Only shard batch tiles across the two v7x TensorCores when each tile
    # carries enough work (>= 256 rows) to beat the per-core fixed cost.
    if grid_steps > 1 and tm_eff >= 256:
        dim_sem = ("parallel",)
    else:
        dim_sem = ("arbitrary",)

    # --- VMEM budget: resident weights + double-buffered activation tiles ---
    weight_bytes = 4 * (in_dim * hp + hp + hp * hp + hp + hp * op + op)
    act_bytes = 4 * (tm_eff * in_dim + tm_eff * op)
    vmem_limit = int(min(max(2 * (weight_bytes + 2 * act_bytes) + (1 << 20), 4 << 20),
                         48 << 20))

    flops = 2 * padded_batch * (in_dim * hp + hp * hp + hp * op)
    transcendentals = 2 * padded_batch * hp
    bytes_accessed = 4 * (
        padded_batch * in_dim
        + in_dim * hp + hp
        + hp * hp + hp
        + hp * op + op
        + padded_batch * op
    )

    out_padded = pl.pallas_call(
        _mlp_kernel,
        out_shape=jax.ShapeDtypeStruct((padded_batch, op), x.dtype),
        grid_spec=pltpu.PrefetchScalarGridSpec(
            num_scalar_prefetch=0,
            grid=grid,
            in_specs=[
                # activation tile streams over the grid
                pl.BlockSpec((tm_eff, in_dim), lambda i: (i, 0)),
                # weights / biases: constant index_map -> fetched once, resident
                pl.BlockSpec((in_dim, hp), lambda i: (0, 0)),
                pl.BlockSpec((1, hp), lambda i: (0, 0)),
                pl.BlockSpec((hp, hp), lambda i: (0, 0)),
                pl.BlockSpec((1, hp), lambda i: (0, 0)),
                pl.BlockSpec((hp, op), lambda i: (0, 0)),
                pl.BlockSpec((1, op), lambda i: (0, 0)),
            ],
            out_specs=pl.BlockSpec((tm_eff, op), lambda i: (i, 0)),
        ),
        compiler_params=pltpu.CompilerParams(
            dimension_semantics=dim_sem,
            vmem_limit_bytes=vmem_limit,
        ),
        cost_estimate=pl.CostEstimate(
            flops=flops,
            transcendentals=transcendentals,
            bytes_accessed=bytes_accessed,
        ),
    )(x, prep["w1"], prep["b1"], prep["w2"], prep["b2"], prep["w3"], prep["b3"])

    # Strip batch/lane padding (fuses into the surrounding jit; keep results
    # padded downstream for very large batches if this slice fails to fuse).
    return out_padded[:batch, :out_dim]


def mlp_reference(x, params):
    h = jnp.tanh(x @ params["W1"].T + params["b1"])
    h = jnp.tanh(h @ params["W2"].T + params["b2"])
    return h @ params["W3"].T + params["b3"]


if __name__ == "__main__":
    input_dim, hidden_dim, output_dim = 4, 32, 2
    # batch=256 now runs as a single grid step (tm = full batch), amortizing
    # the per-call launch overhead and exercising a full MXU M tile.
    batch = 256

    key = jax.random.PRNGKey(0)
    kx, k1, k2, k3 = jax.random.split(key, 4)

    # torch.nn.Linear weight shape is (out_features, in_features).
    params = {
        "W1": _orthogonal(k1, (hidden_dim, input_dim)),
        "b1": jnp.zeros((hidden_dim,), jnp.float32),
        "W2": _orthogonal(k2, (hidden_dim, hidden_dim)),
        "b2": jnp.zeros((hidden_dim,), jnp.float32),
        "W3": _orthogonal(k3, (output_dim, hidden_dim)),
        "b3": jnp.zeros((output_dim,), jnp.float32),
    }

    # One-time layout prep (transpose + lane padding) -- reused every call.
    prep, out_dim = prepare_params(params)

    x = jax.random.normal(kx, (batch, input_dim), dtype=jnp.float32)

    y = mlp_forward(x, prep, out_dim=out_dim)
    y = jax.block_until_ready(y)

    y_ref = mlp_reference(x, params)
    assert y.shape == (batch, output_dim)
    assert jnp.allclose(y, y_ref, atol=1e-5, rtol=1e-5)

    print("KERNEL_OK")
</pallas_src>

<mosaic_0001>
module attributes {stable_mosaic.version = 11 : i64} {
  func.func @_mlp_kernel(%arg0: i32, %arg1: memref<256x4xf32, #tpu.memory_space<vmem>>, %arg2: memref<4x128xf32, #tpu.memory_space<vmem>>, %arg3: memref<1x128xf32, #tpu.memory_space<vmem>>, %arg4: memref<128x128xf32, #tpu.memory_space<vmem>>, %arg5: memref<1x128xf32, #tpu.memory_space<vmem>>, %arg6: memref<128x128xf32, #tpu.memory_space<vmem>>, %arg7: memref<1x128xf32, #tpu.memory_space<vmem>>, %arg8: memref<256x128xf32, #tpu.memory_space<vmem>>) attributes {dimension_semantics = [#tpu.dimension_semantics<arbitrary>], iteration_bounds = array<i64: 1>, scalar_prefetch = 0 : i64, scratch_operands = 0 : i64, tpu.core_type = #tpu.core_type<tc>, window_params = [{transform_indices = @transform_0, window_bounds = array<i64: 256, 4>}, {pipeline_mode = #tpu.pipeline_mode<synchronous>, transform_indices = @transform_1, window_bounds = array<i64: 4, 128>}, {pipeline_mode = #tpu.pipeline_mode<synchronous>, transform_indices = @transform_2, window_bounds = array<i64: 1, 128>}, {pipeline_mode = #tpu.pipeline_mode<synchronous>, transform_indices = @transform_3, window_bounds = array<i64: 128, 128>}, {pipeline_mode = #tpu.pipeline_mode<synchronous>, transform_indices = @transform_4, window_bounds = array<i64: 1, 128>}, {pipeline_mode = #tpu.pipeline_mode<synchronous>, transform_indices = @transform_5, window_bounds = array<i64: 128, 128>}, {pipeline_mode = #tpu.pipeline_mode<synchronous>, transform_indices = @transform_6, window_bounds = array<i64: 1, 128>}, {transform_indices = @transform_7, window_bounds = array<i64: 256, 128>}]} {
    %c0 = arith.constant 0 : index
    %c0_0 = arith.constant 0 : index
    %0 = vector.load %arg1[%c0, %c0_0] : memref<256x4xf32, #tpu.memory_space<vmem>>, vector<256x4xf32>
    %c0_1 = arith.constant 0 : index
    %c0_2 = arith.constant 0 : index
    %1 = vector.load %arg2[%c0_1, %c0_2] : memref<4x128xf32, #tpu.memory_space<vmem>>, vector<4x128xf32>
    %cst = arith.constant dense<0.000000e+00> : vector<256x128xf32>
    %2 = tpu.matmul %0, %1, %cst {dimension_numbers = #tpu.dot_dimension_numbers<[1], [0], [0], [1], [0, 0, 1, 1], [], []>} : vector<256x4xf32>, vector<4x128xf32>, vector<256x128xf32> -> vector<256x128xf32>
    %c0_3 = arith.constant 0 : index
    %c0_4 = arith.constant 0 : index
    %3 = vector.load %arg3[%c0_3, %c0_4] : memref<1x128xf32, #tpu.memory_space<vmem>>, vector<1x128xf32>
    %4 = vector.broadcast %3 : vector<1x128xf32> to vector<256x128xf32>
    %5 = arith.addf %2, %4 : vector<256x128xf32>
    %6 = math.tanh %5 : vector<256x128xf32>
    %c0_5 = arith.constant 0 : index
    %c0_6 = arith.constant 0 : index
    %7 = vector.load %arg4[%c0_5, %c0_6] : memref<128x128xf32, #tpu.memory_space<vmem>>, vector<128x128xf32>
    %cst_7 = arith.constant dense<0.000000e+00> : vector<256x128xf32>
    %8 = tpu.matmul %6, %7, %cst_7 {dimension_numbers = #tpu.dot_dimension_numbers<[1], [0], [0], [1], [0, 0, 1, 1], [], []>} : vector<256x128xf32>, vector<128x128xf32>, vector<256x128xf32> -> vector<256x128xf32>
    %c0_8 = arith.constant 0 : index
    %c0_9 = arith.constant 0 : index
    %9 = vector.load %arg5[%c0_8, %c0_9] : memref<1x128xf32, #tpu.memory_space<vmem>>, vector<1x128xf32>
    %10 = vector.broadcast %9 : vector<1x128xf32> to vector<256x128xf32>
    %11 = arith.addf %8, %10 : vector<256x128xf32>
    %12 = math.tanh %11 : vector<256x128xf32>
    %c0_10 = arith.constant 0 : index
    %c0_11 = arith.constant 0 : index
    %13 = vector.load %arg6[%c0_10, %c0_11] : memref<128x128xf32, #tpu.memory_space<vmem>>, vector<128x128xf32>
    %cst_12 = arith.constant dense<0.000000e+00> : vector<256x128xf32>
    %14 = tpu.matmul %12, %13, %cst_12 {dimension_numbers = #tpu.dot_dimension_numbers<[1], [0], [0], [1], [0, 0, 1, 1], [], []>} : vector<256x128xf32>, vector<128x128xf32>, vector<256x128xf32> -> vector<256x128xf32>
    %c0_13 = arith.constant 0 : index
    %c0_14 = arith.constant 0 : index
    %15 = vector.load %arg7[%c0_13, %c0_14] : memref<1x128xf32, #tpu.memory_space<vmem>>, vector<1x128xf32>
    %16 = vector.broadcast %15 : vector<1x128xf32> to vector<256x128xf32>
    %17 = arith.addf %14, %16 : vector<256x128xf32>
    %c0_15 = arith.constant 0 : index
    %c0_16 = arith.constant 0 : index
    %18 = vector.load %arg8[%c0_15, %c0_16] : memref<256x128xf32, #tpu.memory_space<vmem>>, vector<256x128xf32>
    tpu.vector_store %arg8[%c0_15, %c0_16], %17 {strides = array<i32>} : memref<256x128xf32, #tpu.memory_space<vmem>>, vector<256x128xf32>,
    return
  }
  func.func @transform_0(%arg0: i32) -> (i32, i32) {
    %c0_i32 = arith.constant 0 : i32
    %c0_i32_0 = arith.constant 0 : i32
    return %arg0, %c0_i32 : i32, i32
  }
  func.func @transform_1(%arg0: i32) -> (i32, i32) {
    %c0_i32 = arith.constant 0 : i32
    %c0_i32_0 = arith.constant 0 : i32
    %c0_i32_1 = arith.constant 0 : i32
    return %c0_i32, %c0_i32_0 : i32, i32
  }
  func.func @transform_2(%arg0: i32) -> (i32, i32) {
    %c0_i32 = arith.constant 0 : i32
    %c0_i32_0 = arith.constant 0 : i32
    %c0_i32_1 = arith.constant 0 : i32
    return %c0_i32, %c0_i32_0 : i32, i32
  }
  func.func @transform_3(%arg0: i32) -> (i32, i32) {
    %c0_i32 = arith.constant 0 : i32
    %c0_i32_0 = arith.constant 0 : i32
    %c0_i32_1 = arith.constant 0 : i32
    return %c0_i32, %c0_i32_0 : i32, i32
  }
  func.func @transform_4(%arg0: i32) -> (i32, i32) {
    %c0_i32 = arith.constant 0 : i32
    %c0_i32_0 = arith.constant 0 : i32
    %c0_i32_1 = arith.constant 0 : i32
    return %c0_i32, %c0_i32_0 : i32, i32
  }
  func.func @transform_5(%arg0: i32) -> (i32, i32) {
    %c0_i32 = arith.constant 0 : i32
    %c0_i32_0 = arith.constant 0 : i32
    %c0_i32_1 = arith.constant 0 : i32
    return %c0_i32, %c0_i32_0 : i32, i32
  }
  func.func @transform_6(%arg0: i32) -> (i32, i32) {
    %c0_i32 = arith.constant 0 : i32
    %c0_i32_0 = arith.constant 0 : i32
    %c0_i32_1 = arith.constant 0 : i32
    return %c0_i32, %c0_i32_0 : i32, i32
  }
  func.func @transform_7(%arg0: i32) -> (i32, i32) {
    %c0_i32 = arith.constant 0 : i32
    %c0_i32_0 = arith.constant 0 : i32
    return %arg0, %c0_i32 : i32, i32
  }
}

</mosaic_0001>

<llo_original>
// kernel: mlp_forward.1
$region0: #{mlp_forward.1}
  #allocation0 [shape = 'u32[]', space=smem, size = 0x4, offset = 0x4, fixed_abs, tag = 'smem constant byte address 0x4 - core index']
  #allocation1 [shape = 'u32[72,128]{1,0:T(1,128)}', space=vmem, size = 0x9000, scoped, tag = 'internal scratch']
  %s0 = inlined_call_operand.vmem [shape: f32[256,4], index: 0, kind: input, shape index: {}]
  %s1 = inlined_call_operand.vmem [shape: f32[4,128], index: 1, kind: input, shape index: {}]
  %s2 = inlined_call_operand.vmem [shape: f32[1,128], index: 2, kind: input, shape index: {}]
  %s3 = inlined_call_operand.vmem [shape: f32[128,128], index: 3, kind: input, shape index: {}]
  %s4 = inlined_call_operand.vmem [shape: f32[1,128], index: 4, kind: input, shape index: {}]
  %s5 = inlined_call_operand.vmem [shape: f32[128,128], index: 5, kind: input, shape index: {}]
  %s6 = inlined_call_operand.vmem [shape: f32[1,128], index: 6, kind: input, shape index: {}]
  %s7 = inlined_call_operand.vmem [shape: f32[256,128], index: 7, kind: output, shape index: {}]
  %s8 = sld [smem:[#allocation0]]
  $region38: #{mlp_forward.1} parent=0
    _
  %s10 = ssub.s32 1, %s8
  %s11 = scalar_select 0, %s10, %s8
  // Predicated region
  $region2: #{mlp_forward.1} parent=0 // pred_check
    _
  $region3: #{mlp_forward.1} parent=0 // pred_check_branch
    %13 = sbr.rel (0) target = $region5
  $region4: #{mlp_forward.1} parent=0 // pred_region
    _
  $region5: #{mlp_forward.1} parent=0 // pred_fallthru
    _
  // Predicated region
  $region6: #{mlp_forward.1} parent=0 // pred_check
    _
  $region7: #{mlp_forward.1} parent=0 // pred_check_branch
    %15 = sbr.rel (0) target = $region9
  $region8: #{mlp_forward.1} parent=0 // pred_region
    _
  $region9: #{mlp_forward.1} parent=0 // pred_fallthru
    _
  // Predicated region
  $region10: #{mlp_forward.1} parent=0 // pred_check
    _
  $region11: #{mlp_forward.1} parent=0 // pred_check_branch
    %17 = sbr.rel (0) target = $region13
  $region12: #{mlp_forward.1} parent=0 // pred_region
    _
  $region13: #{mlp_forward.1} parent=0 // pred_fallthru
    _
  // Predicated region
  $region14: #{mlp_forward.1} parent=0 // pred_check
    _
  $region15: #{mlp_forward.1} parent=0 // pred_check_branch
    %19 = sbr.rel (0) target = $region17
  $region16: #{mlp_forward.1} parent=0 // pred_region
    _
  $region17: #{mlp_forward.1} parent=0 // pred_fallthru
    _
  // Predicated region
  $region18: #{mlp_forward.1} parent=0 // pred_check
    _
  $region19: #{mlp_forward.1} parent=0 // pred_check_branch
    %21 = sbr.rel (0) target = $region21
  $region20: #{mlp_forward.1} parent=0 // pred_region
    _
  $region21: #{mlp_forward.1} parent=0 // pred_fallthru
    _
  // Predicated region
  $region22: #{mlp_forward.1} parent=0 // pred_check
    _
  $region23: #{mlp_forward.1} parent=0 // pred_check_branch
    %23 = sbr.rel (0) target = $region25
  $region24: #{mlp_forward.1} parent=0 // pred_region
    _
  $region25: #{mlp_forward.1} parent=0 // pred_fallthru
    _
  // Predicated region
  $region26: #{mlp_forward.1} parent=0 // pred_check
    _
  $region27: #{mlp_forward.1} parent=0 // pred_check_branch
    %25 = sbr.rel (0) target = $region29
  $region28: #{mlp_forward.1} parent=0 // pred_region
    _
  $region29: #{mlp_forward.1} parent=0 // pred_fallthru
    _
  %v26 = vld [vmem:[%s0] sm:$0xff]
  %v27 = vld [vmem:[%s0 + $0x8] sm:$0xff]
  %v28 = vld [vmem:[%s0 + $0x10] sm:$0xff]
  %v29 = vld [vmem:[%s0 + $0x18] sm:$0xff]
  %v30 = vld [vmem:[%s0 + $0x20] sm:$0xff]
  %v31 = vld [vmem:[%s0 + $0x28] sm:$0xff]
  %v32 = vld [vmem:[%s0 + $0x30] sm:$0xff]
  %v33 = vld [vmem:[%s0 + $0x38] sm:$0xff]
  %v34 = vld [vmem:[%s0 + $0x40] sm:$0xff]
  %v35 = vld [vmem:[%s0 + $0x48] sm:$0xff]
  %v36 = vld [vmem:[%s0 + $0x50] sm:$0xff]
  %v37 = vld [vmem:[%s0 + $0x58] sm:$0xff]
  %v38 = vld [vmem:[%s0 + $0x60] sm:$0xff]
  %v39 = vld [vmem:[%s0 + $0x68] sm:$0xff]
  %v40 = vld [vmem:[%s0 + $0x70] sm:$0xff]
  %v41 = vld [vmem:[%s0 + $0x78] sm:$0xff]
  %v42 = vld [vmem:[%s0 + $0x80] sm:$0xff]
  %v43 = vld [vmem:[%s0 + $0x88] sm:$0xff]
  %v44 = vld [vmem:[%s0 + $0x90] sm:$0xff]
  %v45 = vld [vmem:[%s0 + $0x98] sm:$0xff]
  %v46 = vld [vmem:[%s0 + $0xa0] sm:$0xff]
  %v47 = vld [vmem:[%s0 + $0xa8] sm:$0xff]
  %v48 = vld [vmem:[%s0 + $0xb0] sm:$0xff]
  %v49 = vld [vmem:[%s0 + $0xb8] sm:$0xff]
  %v50 = vld [vmem:[%s0 + $0xc0] sm:$0xff]
  %v51 = vld [vmem:[%s0 + $0xc8] sm:$0xff]
  %v52 = vld [vmem:[%s0 + $0xd0] sm:$0xff]
  %v53 = vld [vmem:[%s0 + $0xd8] sm:$0xff]
  %v54 = vld [vmem:[%s0 + $0xe0] sm:$0xff]
  %v55 = vld [vmem:[%s0 + $0xe8] sm:$0xff]
  %v56 = vld [vmem:[%s0 + $0xf0] sm:$0xff]
  %v57 = vld [vmem:[%s0 + $0xf8] sm:$0xff]
  %v58 = vld [vmem:[%s1] sm:$0xf]
  %v59 = vld [vmem:[%s2] sm:$0x1]
  %v61 = vperm.slane %v59, 0
  %vm63 = vcmask 31744
  %v65 = vsel %vm63, %v26, 0
  %v68 = vsel %vm63, %v27, 0
  %v71 = vsel %vm63, %v28, 0
  %v74 = vsel %vm63, %v29, 0
  %v77 = vsel %vm63, %v30, 0
  %v80 = vsel %vm63, %v31, 0
  %v83 = vsel %vm63, %v32, 0
  %v86 = vsel %vm63, %v33, 0
  %v89 = vsel %vm63, %v34, 0
  %v92 = vsel %vm63, %v35, 0
  %v95 = vsel %vm63, %v36, 0
  %v98 = vsel %vm63, %v37, 0
  %v101 = vsel %vm63, %v38, 0
  %v104 = vsel %vm63, %v39, 0
  %v107 = vsel %vm63, %v40, 0
  %v110 = vsel %vm63, %v41, 0
  %v113 = vsel %vm63, %v42, 0
  %v116 = vsel %vm63, %v43, 0
  %v119 = vsel %vm63, %v44, 0
  %v122 = vsel %vm63, %v45, 0
  %v125 = vsel %vm63, %v46, 0
  %v128 = vsel %vm63, %v47, 0
  %v131 = vsel %vm63, %v48, 0
  %v134 = vsel %vm63, %v49, 0
  %v137 = vsel %vm63, %v50, 0
  %v140 = vsel %vm63, %v51, 0
  %v143 = vsel %vm63, %v52, 0
  %v146 = vsel %vm63, %v53, 0
  %v149 = vsel %vm63, %v54, 0
  %v152 = vsel %vm63, %v55, 0
  %v155 = vsel %vm63, %v56, 0
  %v158 = vsel %vm63, %v57, 0
  %vm160 = vcmask 1043456
  %v162 = vsel %vm160, %v58, 0
  %164 = vmatpush.msra.mxu0 0.0
  %165 = vmatpush.msra.mxu0 0.0
  %166 = vmatpush.msra.mxu0 0.0
  %167 = vmatpush.msra.mxu0 0.0
  %168 = vmatpush.msra.mxu0 0.0
  %169 = vmatpush.msra.mxu0 0.0
  %170 = vmatpush.msra.mxu0 0.0
  %171 = vmatpush.msra.mxu0 0.0
  %172 = vmatpush.msra.mxu0 0.0
  %173 = vmatpush.msra.mxu0 0.0
  %174 = vmatpush.msra.mxu0 0.0
  %175 = vmatpush.msra.mxu0 0.0
  %176 = vmatpush.msra.mxu0 0.0
  %177 = vmatpush.msra.mxu0 0.0
  %178 = vmatpush.msra.mxu0 0.0
  %179 = vmatpush.msra.mxu0 %v162
  %180 = vmatmul.f32.gmra.mxu0 %v65
  %v181 = vpop.f32.mrf.mxu0
  %v182 = vadd.f32 %v61, %v181
  %183 = vmatmul.f32.gmra.mxu0 %v68
  %v184 = vpop.f32.mrf.mxu0
  %v185 = vadd.f32 %v61, %v184
  %186 = vmatmul.f32.gmra.mxu0 %v71
  %v187 = vpop.f32.mrf.mxu0
  %v188 = vadd.f32 %v61, %v187
  %189 = vmatmul.f32.gmra.mxu0 %v74
  %v190 = vpop.f32.mrf.mxu0
  %v191 = vadd.f32 %v61, %v190
  %192 = vmatmul.f32.gmra.mxu0 %v77
  %v193 = vpop.f32.mrf.mxu0
  %v194 = vadd.f32 %v61, %v193
  %195 = vmatmul.f32.gmra.mxu0 %v80
  %v196 = vpop.f32.mrf.mxu0
  %v197 = vadd.f32 %v61, %v196
  %198 = vmatmul.f32.gmra.mxu0 %v83
  %v199 = vpop.f32.mrf.mxu0
  %v200 = vadd.f32 %v61, %v199
  %201 = vmatmul.f32.gmra.mxu0 %v86
  %v202 = vpop.f32.mrf.mxu0
  %v203 = vadd.f32 %v61, %v202
  %204 = vmatmul.f32.gmra.mxu0 %v89
  %v205 = vpop.f32.mrf.mxu0
  %v206 = vadd.f32 %v61, %v205
  %207 = vmatmul.f32.gmra.mxu0 %v92
  %v208 = vpop.f32.mrf.mxu0
  %v209 = vadd.f32 %v61, %v208
  %210 = vmatmul.f32.gmra.mxu0 %v95
  %v211 = vpop.f32.mrf.mxu0
  %v212 = vadd.f32 %v61, %v211
  %213 = vmatmul.f32.gmra.mxu0 %v98
  %v214 = vpop.f32.mrf.mxu0
  %v215 = vadd.f32 %v61, %v214
  %216 = vmatmul.f32.gmra.mxu0 %v101
  %v217 = vpop.f32.mrf.mxu0
  %v218 = vadd.f32 %v61, %v217
  %219 = vmatmul.f32.gmra.mxu0 %v104
  %v220 = vpop.f32.mrf.mxu0
  %v221 = vadd.f32 %v61, %v220
  %222 = vmatmul.f32.gmra.mxu0 %v107
  %v223 = vpop.f32.mrf.mxu0
  %v224 = vadd.f32 %v61, %v223
  %225 = vmatmul.f32.gmra.mxu0 %v110
  %v226 = vpop.f32.mrf.mxu0
  %v227 = vadd.f32 %v61, %v226
  %228 = vmatmul.f32.gmra.mxu0 %v113
  %v229 = vpop.f32.mrf.mxu0
  %v230 = vadd.f32 %v61, %v229
  %231 = vmatmul.f32.gmra.mxu0 %v116
  %v232 = vpop.f32.mrf.mxu0
  %v233 = vadd.f32 %v61, %v232
  %234 = vmatmul.f32.gmra.mxu0 %v119
  %v235 = vpop.f32.mrf.mxu0
  %v236 = vadd.f32 %v61, %v235
  %237 = vmatmul.f32.gmra.mxu0 %v122
  %v238 = vpop.f32.mrf.mxu0
  %v239 = vadd.f32 %v61, %v238
  %240 = vmatmul.f32.gmra.mxu0 %v125
  %v241 = vpop.f32.mrf.mxu0
  %v242 = vadd.f32 %v61, %v241
  %243 = vmatmul.f32.gmra.mxu0 %v128
  %v244 = vpop.f32.mrf.mxu0
  %v245 = vadd.f32 %v61, %v244
  %246 = vmatmul.f32.gmra.mxu0 %v131
  %v247 = vpop.f32.mrf.mxu0
  %v248 = vadd.f32 %v61, %v247
  %249 = vmatmul.f32.gmra.mxu0 %v134
  %v250 = vpop.f32.mrf.mxu0
  %v251 = vadd.f32 %v61, %v250
  %252 = vmatmul.f32.gmra.mxu0 %v137
  %v253 = vpop.f32.mrf.mxu0
  %v254 = vadd.f32 %v61, %v253
  %255 = vmatmul.f32.gmra.mxu0 %v140
  %v256 = vpop.f32.mrf.mxu0
  %v257 = vadd.f32 %v61, %v256
  %258 = vmatmul.f32.gmra.mxu0 %v143
  %v259 = vpop.f32.mrf.mxu0
  %v260 = vadd.f32 %v61, %v259
  %261 = vmatmul.f32.gmra.mxu0 %v146
  %v262 = vpop.f32.mrf.mxu0
  %v263 = vadd.f32 %v61, %v262
  %264 = vmatmul.f32.gmra.mxu0 %v149
  %v265 = vpop.f32.mrf.mxu0
  %v266 = vadd.f32 %v61, %v265
  %267 = vmatmul.f32.gmra.mxu0 %v152
  %v268 = vpop.f32.mrf.mxu0
  %v269 = vadd.f32 %v61, %v268
  %270 = vmatmul.f32.gmra.mxu0 %v155
  %v271 = vpop.f32.mrf.mxu0
  %v272 = vadd.f32 %v61, %v271
  %273 = vmatmul.f32.gmra.mxu0 %v158
  %v274 = vpop.f32.mrf.mxu0
  %v275 = vadd.f32 %v61, %v274
  %276 = vdwg.mxu0
  %v277 = vtanh.pop %v182
  %v278 = vtanh.pop %v185
  %v279 = vtanh.pop %v188
  %v280 = vtanh.pop %v191
  %v281 = vtanh.pop %v194
  %v282 = vtanh.pop %v197
  %v283 = vtanh.pop %v200
  %v284 = vtanh.pop %v203
  %v285 = vtanh.pop %v206
  %v286 = vtanh.pop %v209
  %v287 = vtanh.pop %v212
  %v288 = vtanh.pop %v215
  %v289 = vtanh.pop %v218
  %v290 = vtanh.pop %v221
  %v291 = vtanh.pop %v224
  %v292 = vtanh.pop %v227
  %v293 = vtanh.pop %v230
  %v294 = vtanh.pop %v233
  %v295 = vtanh.pop %v236
  %v296 = vtanh.pop %v239
  %v297 = vtanh.pop %v242
  %v298 = vtanh.pop %v245
  %v299 = vtanh.pop %v248
  %v300 = vtanh.pop %v251
  %v301 = vtanh.pop %v254
  %v302 = vtanh.pop %v257
  %v303 = vtanh.pop %v260
  %v304 = vtanh.pop %v263
  %v305 = vtanh.pop %v266
  %v306 = vtanh.pop %v269
  %v307 = vtanh.pop %v272
  %v308 = vtanh.pop %v275
  %v309 = vld [vmem:[%s3] sm:$0xff]
  %v310 = vld [vmem:[%s3 + $0x8] sm:$0xff]
  %v311 = vld [vmem:[%s3 + $0x10] sm:$0xff]
  %v312 = vld [vmem:[%s3 + $0x18] sm:$0xff]
  %v313 = vld [vmem:[%s3 + $0x20] sm:$0xff]
  %v314 = vld [vmem:[%s3 + $0x28] sm:$0xff]
  %v315 = vld [vmem:[%s3 + $0x30] sm:$0xff]
  %v316 = vld [vmem:[%s3 + $0x38] sm:$0xff]
  %v317 = vld [vmem:[%s3 + $0x40] sm:$0xff]
  %v318 = vld [vmem:[%s3 + $0x48] sm:$0xff]
  %v319 = vld [vmem:[%s3 + $0x50] sm:$0xff]
  %v320 = vld [vmem:[%s3 + $0x58] sm:$0xff]
  %v321 = vld [vmem:[%s3 + $0x60] sm:$0xff]
  %v322 = vld [vmem:[%s3 + $0x68] sm:$0xff]
  %v323 = vld [vmem:[%s3 + $0x70] sm:$0xff]
  %v324 = vld [vmem:[%s3 + $0x78] sm:$0xff]
  %v325 = vld [vmem:[%s4] sm:$0x1]
  %v327 = vperm.slane %v325, 0
  %329 = vmatpush.msra.mxu0 %v324
  %330 = vmatpush.msra.mxu0 %v323
  %331 = vmatpush.msra.mxu0 %v322
  %332 = vmatpush.msra.mxu0 %v321
  %333 = vmatpush.msra.mxu0 %v320
  %334 = vmatpush.msra.mxu0 %v319
  %335 = vmatpush.msra.mxu0 %v318
  %336 = vmatpush.msra.mxu0 %v317
  %337 = vmatpush.msra.mxu0 %v316
  %338 = vmatpush.msra.mxu0 %v315
  %339 = vmatpush.msra.mxu0 %v314
  %340 = vmatpush.msra.mxu0 %v313
  %341 = vmatpush.msra.mxu0 %v312
  %342 = vmatpush.msra.mxu0 %v311
  %343 = vmatpush.msra.mxu0 %v310
  %344 = vmatpush.msra.mxu0 %v309
  %345 = vmatmul.f32.gmra.mxu0 %v277
  %v346 = vpop.f32.mrf.mxu0
  %v347 = vadd.f32 %v327, %v346
  %348 = vmatmul.f32.gmra.mxu0 %v278
  %v349 = vpop.f32.mrf.mxu0
  %v350 = vadd.f32 %v327, %v349
  %351 = vmatmul.f32.gmra.mxu0 %v279
  %v352 = vpop.f32.mrf.mxu0
  %v353 = vadd.f32 %v327, %v352
  %354 = vmatmul.f32.gmra.mxu0 %v280
  %v355 = vpop.f32.mrf.mxu0
  %v356 = vadd.f32 %v327, %v355
  %357 = vmatmul.f32.gmra.mxu0 %v281
  %v358 = vpop.f32.mrf.mxu0
  %v359 = vadd.f32 %v327, %v358
  %360 = vmatmul.f32.gmra.mxu0 %v282
  %v361 = vpop.f32.mrf.mxu0
  %v362 = vadd.f32 %v327, %v361
  %363 = vmatmul.f32.gmra.mxu0 %v283
  %v364 = vpop.f32.mrf.mxu0
  %v365 = vadd.f32 %v327, %v364
  %366 = vmatmul.f32.gmra.mxu0 %v284
  %v367 = vpop.f32.mrf.mxu0
  %v368 = vadd.f32 %v327, %v367
  %369 = vmatmul.f32.gmra.mxu0 %v285
  %v370 = vpop.f32.mrf.mxu0
  %v371 = vadd.f32 %v327, %v370
  %372 = vmatmul.f32.gmra.mxu0 %v286
  %v373 = vpop.f32.mrf.mxu0
  %v374 = vadd.f32 %v327, %v373
  %375 = vmatmul.f32.gmra.mxu0 %v287
  %v376 = vpop.f32.mrf.mxu0
  %v377 = vadd.f32 %v327, %v376
  %378 = vmatmul.f32.gmra.mxu0 %v288
  %v379 = vpop.f32.mrf.mxu0
  %v380 = vadd.f32 %v327, %v379
  %381 = vmatmul.f32.gmra.mxu0 %v289
  %v382 = vpop.f32.mrf.mxu0
  %v383 = vadd.f32 %v327, %v382
  %384 = vmatmul.f32.gmra.mxu0 %v290
  %v385 = vpop.f32.mrf.mxu0
  %v386 = vadd.f32 %v327, %v385
  %387 = vmatmul.f32.gmra.mxu0 %v291
  %v388 = vpop.f32.mrf.mxu0
  %v389 = vadd.f32 %v327, %v388
  %390 = vmatmul.f32.gmra.mxu0 %v292
  %v391 = vpop.f32.mrf.mxu0
  %v392 = vadd.f32 %v327, %v391
  %393 = vmatmul.f32.gmra.mxu0 %v293
  %v394 = vpop.f32.mrf.mxu0
  %v395 = vadd.f32 %v327, %v394
  %396 = vmatmul.f32.gmra.mxu0 %v294
  %v397 = vpop.f32.mrf.mxu0
  %v398 = vadd.f32 %v327, %v397
  %399 = vmatmul.f32.gmra.mxu0 %v295
  %v400 = vpop.f32.mrf.mxu0
  %v401 = vadd.f32 %v327, %v400
  %402 = vmatmul.f32.gmra.mxu0 %v296
  %v403 = vpop.f32.mrf.mxu0
  %v404 = vadd.f32 %v327, %v403
  %405 = vmatmul.f32.gmra.mxu0 %v297
  %v406 = vpop.f32.mrf.mxu0
  %v407 = vadd.f32 %v327, %v406
  %408 = vmatmul.f32.gmra.mxu0 %v298
  %v409 = vpop.f32.mrf.mxu0
  %v410 = vadd.f32 %v327, %v409
  %411 = vmatmul.f32.gmra.mxu0 %v299
  %v412 = vpop.f32.mrf.mxu0
  %v413 = vadd.f32 %v327, %v412
  %414 = vmatmul.f32.gmra.mxu0 %v300
  %v415 = vpop.f32.mrf.mxu0
  %v416 = vadd.f32 %v327, %v415
  %417 = vmatmul.f32.gmra.mxu0 %v301
  %v418 = vpop.f32.mrf.mxu0
  %v419 = vadd.f32 %v327, %v418
  %420 = vmatmul.f32.gmra.mxu0 %v302
  %v421 = vpop.f32.mrf.mxu0
  %v422 = vadd.f32 %v327, %v421
  %423 = vmatmul.f32.gmra.mxu0 %v303
  %v424 = vpop.f32.mrf.mxu0
  %v425 = vadd.f32 %v327, %v424
  %426 = vmatmul.f32.gmra.mxu0 %v304
  %v427 = vpop.f32.mrf.mxu0
  %v428 = vadd.f32 %v327, %v427
  %429 = vmatmul.f32.gmra.mxu0 %v305
  %v430 = vpop.f32.mrf.mxu0
  %v431 = vadd.f32 %v327, %v430
  %432 = vmatmul.f32.gmra.mxu0 %v306
  %v433 = vpop.f32.mrf.mxu0
  %v434 = vadd.f32 %v327, %v433
  %435 = vmatmul.f32.gmra.mxu0 %v307
  %v436 = vpop.f32.mrf.mxu0
  %v437 = vadd.f32 %v327, %v436
  %438 = vmatmul.f32.gmra.mxu0 %v308
  %v439 = vpop.f32.mrf.mxu0
  %v440 = vadd.f32 %v327, %v439
  %441 = vdwg.mxu0
  %v442 = vtanh.pop %v347
  %v443 = vtanh.pop %v350
  %v444 = vtanh.pop %v353
  %v445 = vtanh.pop %v356
  %v446 = vtanh.pop %v359
  %v447 = vtanh.pop %v362
  %v448 = vtanh.pop %v365
  %v449 = vtanh.pop %v368
  %v450 = vtanh.pop %v371
  %v451 = vtanh.pop %v374
  %v452 = vtanh.pop %v377
  %v453 = vtanh.pop %v380
  %v454 = vtanh.pop %v383
  %v455 = vtanh.pop %v386
  %v456 = vtanh.pop %v389
  %v457 = vtanh.pop %v392
  %v458 = vtanh.pop %v395
  %v459 = vtanh.pop %v398
  %v460 = vtanh.pop %v401
  %v461 = vtanh.pop %v404
  %v462 = vtanh.pop %v407
  %v463 = vtanh.pop %v410
  %v464 = vtanh.pop %v413
  %v465 = vtanh.pop %v416
  %v466 = vtanh.pop %v419
  %v467 = vtanh.pop %v422
  %v468 = vtanh.pop %v425
  %v469 = vtanh.pop %v428
  %v470 = vtanh.pop %v431
  %v471 = vtanh.pop %v434
  %v472 = vtanh.pop %v437
  %v473 = vtanh.pop %v440
  %v474 = vld [vmem:[%s5] sm:$0xff]
  %v475 = vld [vmem:[%s5 + $0x8] sm:$0xff]
  %v476 = vld [vmem:[%s5 + $0x10] sm:$0xff]
  %v477 = vld [vmem:[%s5 + $0x18] sm:$0xff]
  %v478 = vld [vmem:[%s5 + $0x20] sm:$0xff]
  %v479 = vld [vmem:[%s5 + $0x28] sm:$0xff]
  %v480 = vld [vmem:[%s5 + $0x30] sm:$0xff]
  %v481 = vld [vmem:[%s5 + $0x38] sm:$0xff]
  %v482 = vld [vmem:[%s5 + $0x40] sm:$0xff]
  %v483 = vld [vmem:[%s5 + $0x48] sm:$0xff]
  %v484 = vld [vmem:[%s5 + $0x50] sm:$0xff]
  %v485 = vld [vmem:[%s5 + $0x58] sm:$0xff]
  %v486 = vld [vmem:[%s5 + $0x60] sm:$0xff]
  %v487 = vld [vmem:[%s5 + $0x68] sm:$0xff]
  %v488 = vld [vmem:[%s5 + $0x70] sm:$0xff]
  %v489 = vld [vmem:[%s5 + $0x78] sm:$0xff]
  %v490 = vld [vmem:[%s6] sm:$0x1]
  %v492 = vperm.slane %v490, 0
  %494 = vmatpush.msra.mxu0 %v489
  %495 = vmatpush.msra.mxu0 %v488
  %496 = vmatpush.msra.mxu0 %v487
  %497 = vmatpush.msra.mxu0 %v486
  %498 = vmatpush.msra.mxu0 %v485
  %499 = vmatpush.msra.mxu0 %v484
  %500 = vmatpush.msra.mxu0 %v483
  %501 = vmatpush.msra.mxu0 %v482
  %502 = vmatpush.msra.mxu0 %v481
  %503 = vmatpush.msra.mxu0 %v480
  %504 = vmatpush.msra.mxu0 %v479
  %505 = vmatpush.msra.mxu0 %v478
  %506 = vmatpush.msra.mxu0 %v477
  %507 = vmatpush.msra.mxu0 %v476
  %508 = vmatpush.msra.mxu0 %v475
  %509 = vmatpush.msra.mxu0 %v474
  %510 = vmatmul.f32.gmra.mxu0 %v442
  %v511 = vpop.f32.mrf.mxu0
  %v512 = vadd.f32 %v492, %v511
  %513 = vmatmul.f32.gmra.mxu0 %v443
  %v514 = vpop.f32.mrf.mxu0
  %v515 = vadd.f32 %v492, %v514
  %516 = vmatmul.f32.gmra.mxu0 %v444
  %v517 = vpop.f32.mrf.mxu0
  %v518 = vadd.f32 %v492, %v517
  %519 = vmatmul.f32.gmra.mxu0 %v445
  %v520 = vpop.f32.mrf.mxu0
  %v521 = vadd.f32 %v492, %v520
  %522 = vmatmul.f32.gmra.mxu0 %v446
  %v523 = vpop.f32.mrf.mxu0
  %v524 = vadd.f32 %v492, %v523
  %525 = vmatmul.f32.gmra.mxu0 %v447
  %v526 = vpop.f32.mrf.mxu0
  %v527 = vadd.f32 %v492, %v526
  %528 = vmatmul.f32.gmra.mxu0 %v448
  %v529 = vpop.f32.mrf.mxu0
  %v530 = vadd.f32 %v492, %v529
  %531 = vmatmul.f32.gmra.mxu0 %v449
  %v532 = vpop.f32.mrf.mxu0
  %v533 = vadd.f32 %v492, %v532
  %534 = vmatmul.f32.gmra.mxu0 %v450
  %v535 = vpop.f32.mrf.mxu0
  %v536 = vadd.f32 %v492, %v535
  %537 = vmatmul.f32.gmra.mxu0 %v451
  %v538 = vpop.f32.mrf.mxu0
  %v539 = vadd.f32 %v492, %v538
  %540 = vmatmul.f32.gmra.mxu0 %v452
  %v541 = vpop.f32.mrf.mxu0
  %v542 = vadd.f32 %v492, %v541
  %543 = vmatmul.f32.gmra.mxu0 %v453
  %v544 = vpop.f32.mrf.mxu0
  %v545 = vadd.f32 %v492, %v544
  %546 = vmatmul.f32.gmra.mxu0 %v454
  %v547 = vpop.f32.mrf.mxu0
  %v548 = vadd.f32 %v492, %v547
  %549 = vmatmul.f32.gmra.mxu0 %v455
  %v550 = vpop.f32.mrf.mxu0
  %v551 = vadd.f32 %v492, %v550
  %552 = vmatmul.f32.gmra.mxu0 %v456
  %v553 = vpop.f32.mrf.mxu0
  %v554 = vadd.f32 %v492, %v553
  %555 = vmatmul.f32.gmra.mxu0 %v457
  %v556 = vpop.f32.mrf.mxu0
  %v557 = vadd.f32 %v492, %v556
  %558 = vmatmul.f32.gmra.mxu0 %v458
  %v559 = vpop.f32.mrf.mxu0
  %v560 = vadd.f32 %v492, %v559
  %561 = vmatmul.f32.gmra.mxu0 %v459
  %v562 = vpop.f32.mrf.mxu0
  %v563 = vadd.f32 %v492, %v562
  %564 = vmatmul.f32.gmra.mxu0 %v460
  %v565 = vpop.f32.mrf.mxu0
  %v566 = vadd.f32 %v492, %v565
  %567 = vmatmul.f32.gmra.mxu0 %v461
  %v568 = vpop.f32.mrf.mxu0
  %v569 = vadd.f32 %v492, %v568
  %570 = vmatmul.f32.gmra.mxu0 %v462
  %v571 = vpop.f32.mrf.mxu0
  %v572 = vadd.f32 %v492, %v571
  %573 = vmatmul.f32.gmra.mxu0 %v463
  %v574 = vpop.f32.mrf.mxu0
  %v575 = vadd.f32 %v492, %v574
  %576 = vmatmul.f32.gmra.mxu0 %v464
  %v577 = vpop.f32.mrf.mxu0
  %v578 = vadd.f32 %v492, %v577
  %579 = vmatmul.f32.gmra.mxu0 %v465
  %v580 = vpop.f32.mrf.mxu0
  %v581 = vadd.f32 %v492, %v580
  %582 = vmatmul.f32.gmra.mxu0 %v466
  %v583 = vpop.f32.mrf.mxu0
  %v584 = vadd.f32 %v492, %v583
  %585 = vmatmul.f32.gmra.mxu0 %v467
  %v586 = vpop.f32.mrf.mxu0
  %v587 = vadd.f32 %v492, %v586
  %588 = vmatmul.f32.gmra.mxu0 %v468
  %v589 = vpop.f32.mrf.mxu0
  %v590 = vadd.f32 %v492, %v589
  %591 = vmatmul.f32.gmra.mxu0 %v469
  %v592 = vpop.f32.mrf.mxu0
  %v593 = vadd.f32 %v492, %v592
  %594 = vmatmul.f32.gmra.mxu0 %v470
  %v595 = vpop.f32.mrf.mxu0
  %v596 = vadd.f32 %v492, %v595
  %597 = vmatmul.f32.gmra.mxu0 %v471
  %v598 = vpop.f32.mrf.mxu0
  %v599 = vadd.f32 %v492, %v598
  %600 = vmatmul.f32.gmra.mxu0 %v472
  %v601 = vpop.f32.mrf.mxu0
  %v602 = vadd.f32 %v492, %v601
  %603 = vmatmul.f32.gmra.mxu0 %v473
  %v604 = vpop.f32.mrf.mxu0
  %v605 = vadd.f32 %v492, %v604
  %606 = vdwg.mxu0
  %607 = vst [vmem:[%s7] sm:$0xff] %v512
  %608 = vst [vmem:[%s7 + $0x8] sm:$0xff] %v515
  %609 = vst [vmem:[%s7 + $0x10] sm:$0xff] %v518
  %610 = vst [vmem:[%s7 + $0x18] sm:$0xff] %v521
  %611 = vst [vmem:[%s7 + $0x20] sm:$0xff] %v524
  %612 = vst [vmem:[%s7 + $0x28] sm:$0xff] %v527
  %613 = vst [vmem:[%s7 + $0x30] sm:$0xff] %v530
  %614 = vst [vmem:[%s7 + $0x38] sm:$0xff] %v533
  %615 = vst [vmem:[%s7 + $0x40] sm:$0xff] %v536
  %616 = vst [vmem:[%s7 + $0x48] sm:$0xff] %v539
  %617 = vst [vmem:[%s7 + $0x50] sm:$0xff] %v542
  %618 = vst [vmem:[%s7 + $0x58] sm:$0xff] %v545
  %619 = vst [vmem:[%s7 + $0x60] sm:$0xff] %v548
  %620 = vst [vmem:[%s7 + $0x68] sm:$0xff] %v551
  %621 = vst [vmem:[%s7 + $0x70] sm:$0xff] %v554
  %622 = vst [vmem:[%s7 + $0x78] sm:$0xff] %v557
  %623 = vst [vmem:[%s7 + $0x80] sm:$0xff] %v560
  %624 = vst [vmem:[%s7 + $0x88] sm:$0xff] %v563
  %625 = vst [vmem:[%s7 + $0x90] sm:$0xff] %v566
  %626 = vst [vmem:[%s7 + $0x98] sm:$0xff] %v569
  %627 = vst [vmem:[%s7 + $0xa0] sm:$0xff] %v572
  %628 = vst [vmem:[%s7 + $0xa8] sm:$0xff] %v575
  %629 = vst [vmem:[%s7 + $0xb0] sm:$0xff] %v578
  %630 = vst [vmem:[%s7 + $0xb8] sm:$0xff] %v581
  %631 = vst [vmem:[%s7 + $0xc0] sm:$0xff] %v584
  %632 = vst [vmem:[%s7 + $0xc8] sm:$0xff] %v587
  %633 = vst [vmem:[%s7 + $0xd0] sm:$0xff] %v590
  %634 = vst [vmem:[%s7 + $0xd8] sm:$0xff] %v593
  %635 = vst [vmem:[%s7 + $0xe0] sm:$0xff] %v596
  %636 = vst [vmem:[%s7 + $0xe8] sm:$0xff] %v599
  %637 = vst [vmem:[%s7 + $0xf0] sm:$0xff] %v602
  %638 = vst [vmem:[%s7 + $0xf8] sm:$0xff] %v605
  // Predicated region
  $region30: #{mlp_forward.1} parent=0 // pred_check
    _
  $region31: #{mlp_forward.1} parent=0 // pred_check_branch
    %640 = sbr.rel (0) target = $region33
  $region32: #{mlp_forward.1} parent=0 // pred_region
    _
  $region33: #{mlp_forward.1} parent=0 // pred_fallthru
    _
  // Predicated region
  $region34: #{mlp_forward.1} parent=0 // pred_check
    _
  $region35: #{mlp_forward.1} parent=0 // pred_check_branch
    %642 = sbr.rel (0) target = $region37
  $region36: #{mlp_forward.1} parent=0 // pred_region
    _
  $region37: #{mlp_forward.1} parent=0 // pred_fallthru
    _

</llo_original>
